<compile_context>
chip_gen: v7x
topology: tpu7x:2x2x1
jax: 0.10.0
libtpu: 0.0.40
codegen_flags: <defaults>
</compile_context>

<pallas_src>
import jax
import jax.numpy as jnp
from jax.experimental import pallas as pl
from jax.experimental.pallas import tpu as pltpu

EPS = 1e-5  # nn.BatchNorm2d default


def _convblock_kernel(p_ref, w_ref, gb_ref, o_ref):
    # p_ref  : (K, NHW)       bf16 im2col patches, (cin,kh,kw)-major / (n,h,w)-minor
    # w_ref  : (Cout, K)      bf16 conv weights flattened in the same K order
    # gb_ref : (Cout, 2)      f32 [gamma, beta]
    # o_ref  : (N, Cout, HW)  f32 output, NCHW-compatible (lane-dense HW=256)
    n_batch, _, hw = o_ref.shape
    nhw = p_ref.shape[1]

    # 3x3 conv == one MXU matmul over K = Cin*3*3, f32 accumulation.
    acc = jnp.dot(w_ref[...], p_ref[...],
                  preferred_element_type=jnp.float32)          # (Cout, NHW) f32

    # BatchNorm2d training-mode stats, two-pass (acc is VMEM-resident -> free).
    inv_n = 1.0 / nhw
    mean = jnp.sum(acc, axis=1, keepdims=True) * inv_n          # (Cout, 1)
    centered = acc - mean
    var = jnp.sum(centered * centered, axis=1, keepdims=True) * inv_n

    # Fold BN affine: one mul + one add per element (rsqrt goes to the EUP).
    gamma = gb_ref[:, 0:1]
    beta = gb_ref[:, 1:2]
    scale = gamma * jax.lax.rsqrt(var + EPS)                    # (Cout, 1)
    y = jnp.maximum(centered * scale + beta, 0.0)               # (Cout, NHW)

    # Per-sample stores: NHW is n-major, so slice at 128-aligned lane offsets.
    for n in range(n_batch):                                    # static unroll
        o_ref[n] = y[:, n * hw:(n + 1) * hw].astype(o_ref.dtype)


def conv_block(x_nchw, weight_oihw, bias, gamma, beta):
    """Forward pass of ConvBlock. x_nchw: (N, Cin, H, W) like PyTorch."""
    N, Cin, H, W = x_nchw.shape
    Cout = weight_oihw.shape[0]
    K = Cin * 3 * 3
    HW = H * W
    NHW = N * HW

    # Conv bias cancels exactly under training-mode BN (mean subtraction);
    # only valid because we use batch statistics, not running stats.
    del bias

    # --- wrapper-side im2col, built directly in (K, NHW) order --------------
    # Cin goes first so the stacked taps land in (cin, kh, kw | n, h, w) order
    # with no separate transpose pass; cast to bf16 to halve HBM/DMA bytes.
    x_t = jnp.transpose(x_nchw, (1, 0, 2, 3))                    # (Cin, N, H, W)
    x_pad = jnp.pad(x_t, ((0, 0), (0, 0), (1, 1), (1, 1)))       # pad=1
    taps = jnp.stack([x_pad[:, :, kh:kh + H, kw:kw + W]
                      for kh in range(3) for kw in range(3)], axis=1)
    patches = taps.reshape(K, NHW).astype(jnp.bfloat16)          # (K, NHW)

    w2d = weight_oihw.reshape(Cout, K).astype(jnp.bfloat16)      # same K order
    gb = jnp.stack([gamma, beta], axis=1).astype(jnp.float32)    # (Cout, 2)

    # Single grid step; every operand is a full-array VMEM block (full-dim
    # blocks satisfy the (8,128) rule). Output last dim = 256 -> unmasked vst.
    out = pl.pallas_call(
        _convblock_kernel,
        out_shape=jax.ShapeDtypeStruct((N, Cout, HW), x_nchw.dtype),
        grid=(1,),
        in_specs=[
            pl.BlockSpec((K, NHW), lambda i: (0, 0)),
            pl.BlockSpec((Cout, K), lambda i: (0, 0)),
            pl.BlockSpec((Cout, 2), lambda i: (0, 0)),
        ],
        out_specs=pl.BlockSpec((N, Cout, HW), lambda i: (0, 0, 0)),
        compiler_params=pltpu.CompilerParams(
            dimension_semantics=("arbitrary",)),
    )(patches, w2d, gb)

    # Already (N, Cout, H*W): the final reshape is free (no HBM transpose).
    return out.reshape(N, Cout, H, W)


def _reference(x_nchw, weight_oihw, bias, gamma, beta):
    """Pure-JAX reference matching PyTorch ConvBlock forward (training-mode BN)."""
    y = jax.lax.conv_general_dilated(
        x_nchw, weight_oihw, window_strides=(1, 1), padding=((1, 1), (1, 1)),
        dimension_numbers=("NCHW", "OIHW", "NCHW"))
    y = y + bias[None, :, None, None]
    mean = jnp.mean(y, axis=(0, 2, 3), keepdims=True)
    var = jnp.mean((y - mean) ** 2, axis=(0, 2, 3), keepdims=True)
    y = (y - mean) * jax.lax.rsqrt(var + EPS)
    y = y * gamma[None, :, None, None] + beta[None, :, None, None]
    return jnp.maximum(y, 0.0)


if __name__ == "__main__":
    # Module shapes: ConvBlock(in_ch=4, out_ch=8), input (N=2, C=4, H=W=16).
    N, in_ch, out_ch, H, W = 2, 4, 8, 16, 16

    key = jax.random.PRNGKey(0)
    kx, kw, kb, kg, kbe = jax.random.split(key, 5)

    x = jax.random.normal(kx, (N, in_ch, H, W), dtype=jnp.float32)
    weight = jax.random.normal(kw, (out_ch, in_ch, 3, 3), dtype=jnp.float32) * 0.1
    bias = jax.random.normal(kb, (out_ch,), dtype=jnp.float32) * 0.1
    gamma = 1.0 + 0.1 * jax.random.normal(kg, (out_ch,), dtype=jnp.float32)
    beta = 0.1 * jax.random.normal(kbe, (out_ch,), dtype=jnp.float32)

    out = conv_block(x, weight, bias, gamma, beta)
    out = jax.block_until_ready(out)

    ref = _reference(x, weight, bias, gamma, beta)
    assert out.shape == (N, out_ch, H, W)
    assert bool(jnp.all(jnp.isfinite(out)))
    assert bool(jnp.allclose(out, ref, atol=2e-2, rtol=2e-2))

    print("KERNEL_OK")
</pallas_src>

<mosaic_0001>
module attributes {stable_mosaic.version = 11 : i64} {
  func.func @_convblock_kernel(%arg0: i32, %arg1: memref<36x512xbf16, #tpu.memory_space<vmem>>, %arg2: memref<8x36xbf16, #tpu.memory_space<vmem>>, %arg3: memref<8x2xf32, #tpu.memory_space<vmem>>, %arg4: memref<2x8x256xf32, #tpu.memory_space<vmem>>) attributes {dimension_semantics = [#tpu.dimension_semantics<arbitrary>], iteration_bounds = array<i64: 1>, scalar_prefetch = 0 : i64, scratch_operands = 0 : i64, tpu.core_type = #tpu.core_type<tc>, window_params = [{pipeline_mode = #tpu.pipeline_mode<synchronous>, transform_indices = @transform_0, window_bounds = array<i64: 36, 512>}, {pipeline_mode = #tpu.pipeline_mode<synchronous>, transform_indices = @transform_1, window_bounds = array<i64: 8, 36>}, {pipeline_mode = #tpu.pipeline_mode<synchronous>, transform_indices = @transform_2, window_bounds = array<i64: 8, 2>}, {pipeline_mode = #tpu.pipeline_mode<synchronous>, transform_indices = @transform_3, window_bounds = array<i64: 2, 8, 256>}]} {
    %c0 = arith.constant 0 : index
    %c0_0 = arith.constant 0 : index
    %0 = vector.load %arg2[%c0, %c0_0] : memref<8x36xbf16, #tpu.memory_space<vmem>>, vector<8x36xbf16>
    %c0_1 = arith.constant 0 : index
    %c0_2 = arith.constant 0 : index
    %1 = vector.load %arg1[%c0_1, %c0_2] : memref<36x512xbf16, #tpu.memory_space<vmem>>, vector<36x512xbf16>
    %cst = arith.constant dense<0.000000e+00> : vector<8x512xf32>
    %2 = tpu.matmul %0, %1, %cst {dimension_numbers = #tpu.dot_dimension_numbers<[1], [0], [0], [1], [0, 0, 1, 1], [], []>} : vector<8x36xbf16>, vector<36x512xbf16>, vector<8x512xf32> -> vector<8x512xf32>
    %cst_3 = arith.constant dense<0.000000e+00> : vector<8xf32>
    %3 = vector.multi_reduction <add>, %2, %cst_3 [1] : vector<8x512xf32> to vector<8xf32>
    %4 = vector.shape_cast %3 : vector<8xf32> to vector<8x1xf32>
    %cst_4 = arith.constant 0.001953125 : f32
    %5 = vector.broadcast %cst_4 : f32 to vector<8x1xf32>
    %6 = arith.mulf %4, %5 : vector<8x1xf32>
    %7 = vector.broadcast %6 : vector<8x1xf32> to vector<8x512xf32>
    %8 = arith.subf %2, %7 : vector<8x512xf32>
    %9 = arith.mulf %8, %8 : vector<8x512xf32>
    %cst_5 = arith.constant dense<0.000000e+00> : vector<8xf32>
    %10 = vector.multi_reduction <add>, %9, %cst_5 [1] : vector<8x512xf32> to vector<8xf32>
    %11 = vector.shape_cast %10 : vector<8xf32> to vector<8x1xf32>
    %cst_6 = arith.constant 0.001953125 : f32
    %12 = vector.broadcast %cst_6 : f32 to vector<8x1xf32>
    %13 = arith.mulf %11, %12 : vector<8x1xf32>
    %c0_7 = arith.constant 0 : index
    %c0_8 = arith.constant 0 : index
    %14 = vector.load %arg3[%c0_7, %c0_8] : memref<8x2xf32, #tpu.memory_space<vmem>>, vector<8x1xf32>
    %c0_9 = arith.constant 0 : index
    %c1 = arith.constant 1 : index
    %15 = vector.load %arg3[%c0_9, %c1] : memref<8x2xf32, #tpu.memory_space<vmem>>, vector<8x1xf32>
    %cst_10 = arith.constant 9.99999974E-6 : f32
    %16 = vector.broadcast %cst_10 : f32 to vector<8x1xf32>
    %17 = arith.addf %13, %16 : vector<8x1xf32>
    %18 = math.rsqrt %17 : vector<8x1xf32>
    %19 = arith.mulf %14, %18 : vector<8x1xf32>
    %20 = vector.broadcast %19 : vector<8x1xf32> to vector<8x512xf32>
    %21 = arith.mulf %8, %20 : vector<8x512xf32>
    %22 = vector.broadcast %15 : vector<8x1xf32> to vector<8x512xf32>
    %23 = arith.addf %21, %22 : vector<8x512xf32>
    %cst_11 = arith.constant 0.000000e+00 : f32
    %24 = vector.broadcast %cst_11 : f32 to vector<8x512xf32>
    %25 = arith.maximumf %23, %24 : vector<8x512xf32>
    %26 = vector.extract_strided_slice %25 {offsets = [0, 0], sizes = [8, 256], strides = [1, 1]} : vector<8x512xf32> to vector<8x256xf32>
    %c0_12 = arith.constant 0 : index
    %c0_13 = arith.constant 0 : index
    %c0_14 = arith.constant 0 : index
    %27 = vector.load %arg4[%c0_12, %c0_13, %c0_14] : memref<2x8x256xf32, #tpu.memory_space<vmem>>, vector<1x8x256xf32>
    %28 = vector.shape_cast %27 : vector<1x8x256xf32> to vector<8x256xf32>
    %29 = vector.shape_cast %26 : vector<8x256xf32> to vector<1x8x256xf32>
    tpu.vector_store %arg4[%c0_12, %c0_13, %c0_14], %29 {strides = array<i32>} : memref<2x8x256xf32, #tpu.memory_space<vmem>>, vector<1x8x256xf32>,
    %30 = vector.extract_strided_slice %25 {offsets = [0, 256], sizes = [8, 256], strides = [1, 1]} : vector<8x512xf32> to vector<8x256xf32>
    %c1_15 = arith.constant 1 : index
    %c0_16 = arith.constant 0 : index
    %c0_17 = arith.constant 0 : index
    %31 = vector.load %arg4[%c1_15, %c0_16, %c0_17] : memref<2x8x256xf32, #tpu.memory_space<vmem>>, vector<1x8x256xf32>
    %32 = vector.shape_cast %31 : vector<1x8x256xf32> to vector<8x256xf32>
    %33 = vector.shape_cast %30 : vector<8x256xf32> to vector<1x8x256xf32>
    tpu.vector_store %arg4[%c1_15, %c0_16, %c0_17], %33 {strides = array<i32>} : memref<2x8x256xf32, #tpu.memory_space<vmem>>, vector<1x8x256xf32>,
    return
  }
  func.func @transform_0(%arg0: i32) -> (i32, i32) {
    %c0_i32 = arith.constant 0 : i32
    %c0_i32_0 = arith.constant 0 : i32
    %c0_i32_1 = arith.constant 0 : i32
    return %c0_i32, %c0_i32_0 : i32, i32
  }
  func.func @transform_1(%arg0: i32) -> (i32, i32) {
    %c0_i32 = arith.constant 0 : i32
    %c0_i32_0 = arith.constant 0 : i32
    %c0_i32_1 = arith.constant 0 : i32
    return %c0_i32, %c0_i32_0 : i32, i32
  }
  func.func @transform_2(%arg0: i32) -> (i32, i32) {
    %c0_i32 = arith.constant 0 : i32
    %c0_i32_0 = arith.constant 0 : i32
    %c0_i32_1 = arith.constant 0 : i32
    return %c0_i32, %c0_i32_0 : i32, i32
  }
  func.func @transform_3(%arg0: i32) -> (i32, i32, i32) {
    %c0_i32 = arith.constant 0 : i32
    %c0_i32_0 = arith.constant 0 : i32
    %c0_i32_1 = arith.constant 0 : i32
    %c0_i32_2 = arith.constant 0 : i32
    return %c0_i32, %c0_i32_0, %c0_i32_1 : i32, i32, i32
  }
}

</mosaic_0001>

<llo_original>
// kernel: tpu_custom_call.1
$region0: #{tpu_custom_call.1}
  #allocation0 [shape = 'u32[]', space=smem, size = 0x4, offset = 0x4, fixed_abs, tag = 'smem constant byte address 0x4 - core index']
  #allocation1 [shape = 'u32[144,128]{1,0:T(1,128)}', space=vmem, size = 0x12000, scoped, tag = 'internal scratch']
  %s0 = inlined_call_operand.hbm [shape: bf16[36,512], index: 0, kind: input, shape index: {}]
  %s1 = inlined_call_operand.vmem [shape: bf16[8,36], index: 1, kind: input, shape index: {}]
  %s2 = inlined_call_operand.vmem [shape: f32[8,2], index: 2, kind: input, shape index: {}]
  %s3 = inlined_call_operand.hbm [shape: f32[2,8,256], index: 3, kind: output, shape index: {}]
  %s4 = sld [smem:[#allocation0]]
  $region26: #{tpu_custom_call.1} parent=0
    _
  %s6 = ssub.s32 1, %s4
  %s7 = scalar_select 0, %s6, %s4
  $region1: #{tpu_custom_call.1} parent=0
    #allocation2 [shape = 'u8[40960]{0}', space=vmem, size = 0xa000, scoped, tag = 'input window, operand 0, single buffered']
    #allocation3 [shape = 's32[1]{0}', space=sflag, size = 0x4, scoped, tag = 'scoped memory for tpu_custom_call.1']
    #allocation4 [shape = 's32[1]{0}', space=sflag, size = 0x4, scoped, tag = 'scoped memory for tpu_custom_call.1']
    #allocation5 [shape = 'u8[16384]{0}', space=vmem, size = 0x4000, scoped, tag = 'output window, operand 0, single buffered']
    %8 = vsyncpa [#allocation3], 0
    %9 = vsyncpa [#allocation4], 0
    // Predicated region
    $region2: #{tpu_custom_call.1} parent=1 // pred_check
      _
    $region3: #{tpu_custom_call.1} parent=1 // pred_check_branch
      %11 = sbr.rel (0) target = $region5
    $region4: #{tpu_custom_call.1} parent=1 // pred_region
      %s13 = ssub.s32 1280, 1280
      %14 = vsyncadd [#allocation3], %s13
      %s15 = sshll.u32 [#allocation2], 4
      %s16 = int_to_ptr.vmem [resolvable:$true] %s15
      %21 = dma.hbm_to_vmem [thread:$0]  %s0, 1280, %s16, [#allocation3], 256, 256, 16
    $region5: #{tpu_custom_call.1} parent=1 // pred_fallthru
      _
    // Predicated region
    $region6: #{tpu_custom_call.1} parent=1 // pred_check
      _
    $region7: #{tpu_custom_call.1} parent=1 // pred_check_branch
      %23 = sbr.rel (0) target = $region9
    $region8: #{tpu_custom_call.1} parent=1 // pred_region
      _
    $region9: #{tpu_custom_call.1} parent=1 // pred_fallthru
      _
    // Predicated region
    $region10: #{tpu_custom_call.1} parent=1 // pred_check
      _
    $region11: #{tpu_custom_call.1} parent=1 // pred_check_branch
      %25 = sbr.rel (0) target = $region13
    $region12: #{tpu_custom_call.1} parent=1 // pred_region
      _
    $region13: #{tpu_custom_call.1} parent=1 // pred_fallthru
      _
    // Predicated region
    $region14: #{tpu_custom_call.1} parent=1 // pred_check
      _
    $region15: #{tpu_custom_call.1} parent=1 // pred_check_branch
      %27 = sbr.rel (0) target = $region17
    $region16: #{tpu_custom_call.1} parent=1 // pred_region
      %28 = dma.done [#allocation3], 1280
    $region17: #{tpu_custom_call.1} parent=1 // pred_fallthru
      _
    %v30 = vld [vmem:[%s1] sm:$0xf]
    %v31 = vld [vmem:[#allocation2] sm:$0xff]
    %v32 = vld [vmem:[#allocation2 + $0x8] sm:$0xff]
    %v33 = vld [vmem:[#allocation2 + $0x10] sm:$0xff]
    %v34 = vld [vmem:[#allocation2 + $0x18] sm:$0xff]
    %v35 = vld [vmem:[#allocation2 + $0x20] sm:$0xff]
    %v36 = vld [vmem:[#allocation2 + $0x28] sm:$0xff]
    %v37 = vld [vmem:[#allocation2 + $0x30] sm:$0xff]
    %v38 = vld [vmem:[#allocation2 + $0x38] sm:$0xff]
    %v39 = vld [vmem:[#allocation2 + $0x40] sm:$0x33]
    %v40 = vld [vmem:[#allocation2 + $0x48] sm:$0x33]
    %v51 = vunpack.c.l.b16 %v31
    %v52 = vunpack.c.h.b16 %v31
    %v53 = vunpack.c.l.b16 %v32
    %v54 = vunpack.c.h.b16 %v32
    %v55 = vunpack.c.l.b16 %v33
    %v56 = vunpack.c.h.b16 %v33
    %v57 = vunpack.c.l.b16 %v34
    %v58 = vunpack.c.h.b16 %v34
    %v59 = vunpack.c.l.b16 %v35
    %v60 = vunpack.c.h.b16 %v35
    %v61 = vunpack.c.l.b16 %v36
    %v62 = vunpack.c.h.b16 %v36
    %v63 = vunpack.c.l.b16 %v37
    %v64 = vunpack.c.h.b16 %v37
    %v65 = vunpack.c.l.b16 %v38
    %v66 = vunpack.c.h.b16 %v38
    %v67 = vunpack.c.l.b16 %v39
    %v68 = vunpack.c.h.b16 %v39
    %v69 = vunpack.c.l.b16 %v40
    %v70 = vunpack.c.h.b16 %v40
    %v71 = vpack.c.b16 %v55, %v51
    %v72 = vpack.c.b16 %v56, %v52
    %v73 = vpack.c.b16 %v57, %v53
    %v74 = vpack.c.b16 %v58, %v54
    %v75 = vpack.c.b16 %v63, %v59
    %v76 = vpack.c.b16 %v64, %v60
    %v77 = vpack.c.b16 %v65, %v61
    %v78 = vpack.c.b16 %v66, %v62
    %v79 = vpack.c.b16 %v67, %v67
    %v80 = vpack.c.b16 %v68, %v68
    %v81 = vpack.c.b16 %v69, %v69
    %v82 = vpack.c.b16 %v70, %v70
    %vm91 = vcmask 293888
    %v93 = vsel %vm91, %v30, 0
    %vm95 = vcmask 1041408
    %v97 = vsel %vm95, %v79, 0
    %v100 = vsel %vm95, %v80, 0
    %v103 = vsel %vm95, %v81, 0
    %v106 = vsel %vm95, %v82, 0
    %108 = vmatprep.subr.bf16.mxu0 %v72
    %109 = vmatpush1.bf16.msra.mxu0 %v71
    %110 = vmatprep.subr.bf16.mxu0 %v76
    %111 = vmatpush1.bf16.msra.mxu0 %v75
    %112 = vmatprep.subr.bf16.mxu0 %v100
    %113 = vmatpush1.bf16.msra.mxu0 %v97
    %114 = vmatprep.subr.bf16.mxu0 0
    %115 = vmatpush1.bf16.msra.mxu0 0
    %116 = vmatprep.subr.bf16.mxu0 0
    %117 = vmatpush1.bf16.msra.mxu0 0
    %118 = vmatprep.subr.bf16.mxu0 0
    %119 = vmatpush1.bf16.msra.mxu0 0
    %120 = vmatprep.subr.bf16.mxu0 0
    %121 = vmatpush1.bf16.msra.mxu0 0
    %122 = vmatprep.subr.bf16.mxu0 0
    %123 = vmatpush1.bf16.msra.mxu0 0
    %124 = vmatprep.subr.bf16.mxu0 0
    %125 = vmatpush1.bf16.msra.mxu0 0
    %126 = vmatprep.subr.bf16.mxu0 0
    %127 = vmatpush1.bf16.msra.mxu0 0
    %128 = vmatprep.subr.bf16.mxu0 0
    %129 = vmatpush1.bf16.msra.mxu0 0
    %130 = vmatprep.subr.bf16.mxu0 0
    %131 = vmatpush1.bf16.msra.mxu0 0
    %132 = vmatprep.subr.bf16.mxu0 0
    %133 = vmatpush1.bf16.msra.mxu0 0
    %134 = vmatprep.subr.bf16.mxu0 0
    %135 = vmatpush1.bf16.msra.mxu0 0
    %136 = vmatprep.subr.bf16.mxu0 0
    %137 = vmatpush1.bf16.msra.mxu0 0
    %138 = vmatprep.subr.bf16.mxu0 0
    %139 = vmatpush1.bf16.msra.mxu0 0
    %140 = vmatprep.mubr.bf16.mxu0 0
    %141 = vmatmul.mubr.bf16.gmra.mrb[0].mxu0 %v93
    %v142 = vpop.f32.mrb[0].mxu0
    %v143 = vadd.f32 0.0, %v142
    %v144 = vpop.f32.mrb[0].mxu0
    %v145 = vadd.f32 0.0, %v144
    %v146 = vpop.f32.mrb[0].mxu0
    %v147 = vpop.f32.mrb[0].mxu0
    %148 = vdwg.mxu0
    %149 = vmatprep.subr.bf16.mxu0 %v74
    %150 = vmatpush1.bf16.msra.mxu0 %v73
    %151 = vmatprep.subr.bf16.mxu0 %v78
    %152 = vmatpush1.bf16.msra.mxu0 %v77
    %153 = vmatprep.subr.bf16.mxu0 %v106
    %154 = vmatpush1.bf16.msra.mxu0 %v103
    %155 = vmatprep.subr.bf16.mxu0 0
    %156 = vmatpush1.bf16.msra.mxu0 0
    %157 = vmatprep.subr.bf16.mxu0 0
    %158 = vmatpush1.bf16.msra.mxu0 0
    %159 = vmatprep.subr.bf16.mxu0 0
    %160 = vmatpush1.bf16.msra.mxu0 0
    %161 = vmatprep.subr.bf16.mxu0 0
    %162 = vmatpush1.bf16.msra.mxu0 0
    %163 = vmatprep.subr.bf16.mxu0 0
    %164 = vmatpush1.bf16.msra.mxu0 0
    %165 = vmatprep.subr.bf16.mxu0 0
    %166 = vmatpush1.bf16.msra.mxu0 0
    %167 = vmatprep.subr.bf16.mxu0 0
    %168 = vmatpush1.bf16.msra.mxu0 0
    %169 = vmatprep.subr.bf16.mxu0 0
    %170 = vmatpush1.bf16.msra.mxu0 0
    %171 = vmatprep.subr.bf16.mxu0 0
    %172 = vmatpush1.bf16.msra.mxu0 0
    %173 = vmatprep.subr.bf16.mxu0 0
    %174 = vmatpush1.bf16.msra.mxu0 0
    %175 = vmatprep.subr.bf16.mxu0 0
    %176 = vmatpush1.bf16.msra.mxu0 0
    %177 = vmatprep.subr.bf16.mxu0 0
    %178 = vmatpush1.bf16.msra.mxu0 0
    %179 = vmatprep.subr.bf16.mxu0 0
    %180 = vmatpush1.bf16.msra.mxu0 0
    %181 = vmatprep.mubr.bf16.mxu0 0
    %182 = vmatmul.mubr.bf16.gmra.mrb[0].mxu0 %v93
    %v183 = vpop.f32.mrb[0].mxu0
    %v184 = vadd.f32 0.0, %v183
    %v185 = vpop.f32.mrb[0].mxu0
    %v186 = vadd.f32 0.0, %v185
    %v187 = vpop.f32.mrb[0].mxu0
    %v188 = vpop.f32.mrb[0].mxu0
    %189 = vdwg.mxu0
    %v190 = vadd.f32 %v143, %v145
    %v191 = vadd.f32 %v190, %v184
    %v192 = vadd.f32 %v191, %v186
    %193 = vadd.xlane.f32.xlu0 %v192
    %v194 = vpop.xlane.xlu0 %193
    %v195 = vmul.f32 %v194, 0.001953125
    %v196 = vsub.f32 %v143, %v195
    %v197 = vsub.f32 %v145, %v195
    %v198 = vsub.f32 %v184, %v195
    %v199 = vsub.f32 %v186, %v195
    %v200 = vmul.f32 %v196, %v196
    %v201 = vmul.f32 %v197, %v197
    %v202 = vmul.f32 %v198, %v198
    %v203 = vmul.f32 %v199, %v199
    %v204 = vadd.f32 %v200, %v201
    %v205 = vadd.f32 %v204, %v202
    %v206 = vadd.f32 %v205, %v203
    %207 = vadd.xlane.f32.xlu0 %v206
    %v208 = vpop.xlane.xlu0 %207
    %v209 = vmul.f32 %v208, 0.001953125
    %v210 = vld [vmem:[%s2] sm:$0xff]
    %v211 = vadd.f32 %v209, 1e-05
    %v212 = vrsqrt.pop %v211
    %v213 = vmul.f32 %v210, %v212
    %215 = vset.pattern.permute.xlu0 0
    %216 = vperm.xlu0 %215, %v213
    %v217 = vpop.permute.xlu0 %216
    %v219 = vmul.f32 %v196, %v217
    %v220 = vmul.f32 %v197, %v217
    %v221 = vmul.f32 %v198, %v217
    %v222 = vmul.f32 %v199, %v217
    %224 = vset.pattern.permute.xlu0 1
    %225 = vperm.xlu0 %224, %v210
    %v226 = vpop.permute.xlu0 %225
    %v228 = vadd.f32 %v219, %v226
    %v229 = vadd.f32 %v220, %v226
    %v230 = vadd.f32 %v221, %v226
    %v231 = vadd.f32 %v222, %v226
    %v232 = vmax.f32 %v228, 0.0
    %v233 = vmax.f32 %v229, 0.0
    %v234 = vmax.f32 %v230, 0.0
    %v235 = vmax.f32 %v231, 0.0
    %236 = vst [vmem:[#allocation5] sm:$0xff] %v232
    %237 = vst [vmem:[#allocation5 + $0x8] sm:$0xff] %v233
    %s238 = scalar_lea.vmem [#allocation5], 16
    %239 = vst [vmem:[%s238] sm:$0xff] %v234
    %240 = vst [vmem:[%s238 + $0x8] sm:$0xff] %v235
    // Predicated region
    $region18: #{tpu_custom_call.1} parent=1 // pred_check
      _
    $region19: #{tpu_custom_call.1} parent=1 // pred_check_branch
      %242 = sbr.rel (0) target = $region21
    $region20: #{tpu_custom_call.1} parent=1 // pred_region
      %s244 = ssub.s32 512, 512
      %245 = vsyncadd [#allocation4], %s244
      %s246 = sshll.u32 [#allocation5], 4
      %s247 = int_to_ptr.vmem [resolvable:$true] %s246
      %252 = dma.vmem_to_hbm [thread:$0]  %s247, 512, %s3, [#allocation4], 256, 256, 16
    $region21: #{tpu_custom_call.1} parent=1 // pred_fallthru
      _
    // Predicated region
    $region22: #{tpu_custom_call.1} parent=1 // pred_check
      _
    $region23: #{tpu_custom_call.1} parent=1 // pred_check_branch
      %254 = sbr.rel (0) target = $region25
    $region24: #{tpu_custom_call.1} parent=1 // pred_region
      %255 = dma.done [#allocation4], 512
    $region25: #{tpu_custom_call.1} parent=1 // pred_fallthru
      _
    %256 = vsyncpa [#allocation3], 1
    %257 = vsyncpa [#allocation4], 1

</llo_original>
